<compile_context>
chip_gen: v7x
topology: tpu7x:2x2x1
jax: 0.10.0
libtpu: 0.0.40
codegen_flags: <defaults>
</compile_context>

<pallas_src>
import functools

import jax
import jax.numpy as jnp
from jax.experimental import pallas as pl
from jax.experimental.pallas import tpu as pltpu

# ----------------------------- config ---------------------------------------
NUM_CLASSES = 10
DIM_IN = 128          # encoder output dim (dim_in in the PyTorch module)
FEAT_DIM = 50         # projection head output dim
LANE = 128            # lane-dense padded width for FEAT_DIM / NUM_CLASSES
FUSED = LANE + DIM_IN  # [fc_w (padded to 128) | head_linear1_w (128)] fused RHS
BN_EPS = 1e-5         # nn.BatchNorm1d default eps
NORM_EPS = 1e-12      # F.normalize default eps
TILE_B_MAX = 128      # batch tile for the gridded encoder/fc stage

_VMEM = pl.BlockSpec(memory_space=pltpu.MemorySpace.VMEM)


def _round_up(a, m):
    return (a + m - 1) // m * m


# ----------------------------- kernels --------------------------------------
def _enc_fc_h1_kernel(x1_ref, x2_ref, x3_ref, enc_w_ref, enc_b_ref,
                      fch_w_ref, fch_b_ref, logits_ref, h_ref):
    """Per batch tile: encoder (Linear+ReLU stand-in), then one fused
    (128, 256) RHS = [fc_w | head_linear1_w] matmul per view."""
    # TODO(synk): QResNet is not defined in the provided module; this
    # Linear(C*L -> 128) + ReLU is a deterministic stand-in for the encoder.
    enc_w = enc_w_ref[...]
    enc_b = enc_b_ref[...]
    fch_w = fch_w_ref[...]
    fch_b = fch_b_ref[...]

    def enc_fc_h1(x_ref):
        f = jnp.dot(x_ref[...].astype(jnp.bfloat16), enc_w,
                    preferred_element_type=jnp.float32)
        f = jnp.maximum(f + enc_b, 0.0)                      # (TILE_B, D) f32
        # 256-wide RHS fills the 2x256^2 MXU on v6e/v7x; the unused 128-lane
        # half of each view's output is discarded (negligible next to the
        # K-contraction encoder matmul).
        return jnp.dot(f.astype(jnp.bfloat16), fch_w,
                       preferred_element_type=jnp.float32) + fch_b

    logits_ref[...] = enc_fc_h1(x1_ref)[:, :LANE]   # view 1 -> fc logits (padded)
    h_ref[0] = enc_fc_h1(x2_ref)[:, LANE:]          # view 2 -> head linear1 pre-BN
    h_ref[1] = enc_fc_h1(x3_ref)[:, LANE:]          # view 3 -> head linear1 pre-BN


def _head_tail_kernel(b_true, h_ref, vec_ref, h2_w_ref, feat_ref):
    """BatchNorm1d (training-mode batch stats, computed per view, matching the
    two separate head() calls in PyTorch) + ReLU + Linear2 + F.normalize."""
    # TODO(synk): BatchNorm1d running_mean/running_var updates (training-mode
    # side effect in PyTorch) are not tracked; forward outputs are unaffected.
    bn_g = vec_ref[0:1, :]
    bn_b = vec_ref[1:2, :]
    h2_b = vec_ref[2:3, :]
    h2_w = h2_w_ref[...]
    b_pad = h_ref.shape[1]
    valid = jax.lax.broadcasted_iota(jnp.int32, (b_pad, 1), 0) < b_true
    inv_n = 1.0 / float(b_true)

    for v in range(2):          # leading-dim index: free view, no copies/concat
        hv = h_ref[v]                                            # (B_pad, D)
        mean = jnp.sum(jnp.where(valid, hv, 0.0), axis=0, keepdims=True) * inv_n
        cen = hv - mean
        var = jnp.sum(jnp.where(valid, cen * cen, 0.0), axis=0,
                      keepdims=True) * inv_n                     # biased var
        hn = cen * jax.lax.rsqrt(var + BN_EPS) * bn_g + bn_b
        hr = jnp.maximum(hn, 0.0)
        z = jnp.dot(hr.astype(jnp.bfloat16), h2_w,
                    preferred_element_type=jnp.float32) + h2_b   # (B_pad, LANE)
        # F.normalize(dim=1): x * rsqrt(max(sumsq, eps^2)); zero-padded output
        # columns contribute nothing to sumsq, so the norm is exact.
        sumsq = jnp.sum(z * z, axis=1, keepdims=True)
        inv = jax.lax.rsqrt(jnp.maximum(sumsq, NORM_EPS * NORM_EPS))
        feat_ref[v] = z * inv


def _eval_kernel(x_ref, enc_w_ref, enc_b_ref, fch_w_ref, fch_b_ref, logits_ref):
    f = jnp.dot(x_ref[...].astype(jnp.bfloat16), enc_w_ref[...],
                preferred_element_type=jnp.float32)
    f = jnp.maximum(f + enc_b_ref[...], 0.0)
    out = jnp.dot(f.astype(jnp.bfloat16), fch_w_ref[...],
                  preferred_element_type=jnp.float32) + fch_b_ref[...]
    logits_ref[...] = out[:, :LANE]


# ----------------------------- forward --------------------------------------
def ccqnet_forward(params, data, data_t1=None, data_t2=None, mode="train"):
    """data: (B, C, L) float32 (or bf16). Train mode returns
    (feat_mlp2, feat_mlp3, logits); eval mode returns logits."""
    B = data.shape[0]
    tile_b = min(TILE_B_MAX, _round_up(B, 8))
    b_pad = _round_up(B, tile_b)
    grid = (b_pad // tile_b,)

    def prep(x):
        # TODO(synk): fuse this flatten + bf16 cast into the upstream data
        # producer / augmentation pipeline so it is not a standalone XLA pass.
        x = x.reshape(x.shape[0], -1).astype(jnp.bfloat16)
        if b_pad != x.shape[0]:
            x = jnp.pad(x, ((0, b_pad - x.shape[0]), (0, 0)))
        return x

    x1 = prep(data)
    K = x1.shape[1]

    # Per-step VMEM footprint (double-buffered blocks + resident weights) and
    # cost estimate for the gridded encoder/fc/head-linear1 stage.
    blk_bytes = 3 * tile_b * K * 2 + tile_b * LANE * 4 + 2 * tile_b * DIM_IN * 4
    wgt_bytes = K * DIM_IN * 2 + DIM_IN * FUSED * 2 + (DIM_IN + FUSED) * 4
    vmem1 = int(min(64 << 20, max(16 << 20, 2 * (blk_bytes + wgt_bytes) + (8 << 20))))
    flops1 = 2 * 3 * b_pad * K * DIM_IN + 2 * 3 * b_pad * DIM_IN * FUSED
    bytes1 = (3 * b_pad * K * 2 + wgt_bytes
              + b_pad * LANE * 4 + 2 * b_pad * DIM_IN * 4)

    x_spec = pl.BlockSpec((tile_b, K), lambda i: (i, 0))
    enc_w_spec = pl.BlockSpec((K, DIM_IN), lambda i: (0, 0))
    enc_b_spec = pl.BlockSpec((1, DIM_IN), lambda i: (0, 0))
    fch_w_spec = pl.BlockSpec((DIM_IN, FUSED), lambda i: (0, 0))
    fch_b_spec = pl.BlockSpec((1, FUSED), lambda i: (0, 0))
    logits_spec = pl.BlockSpec((tile_b, LANE), lambda i: (i, 0))
    cparams1 = pltpu.CompilerParams(dimension_semantics=("parallel",),
                                    vmem_limit_bytes=vmem1)

    if mode == "train":
        x2, x3 = prep(data_t1), prep(data_t2)
        logits_pad, h_all = pl.pallas_call(
            _enc_fc_h1_kernel,
            grid=grid,
            in_specs=[x_spec, x_spec, x_spec,
                      enc_w_spec, enc_b_spec, fch_w_spec, fch_b_spec],
            out_specs=(logits_spec,
                       pl.BlockSpec((2, tile_b, DIM_IN), lambda i: (0, i, 0))),
            out_shape=(jax.ShapeDtypeStruct((b_pad, LANE), jnp.float32),
                       jax.ShapeDtypeStruct((2, b_pad, DIM_IN), jnp.float32)),
            compiler_params=cparams1,
            cost_estimate=pl.CostEstimate(flops=flops1, transcendentals=0,
                                          bytes_accessed=bytes1),
        )(x1, x2, x3, params["enc_w"], params["enc_b"],
          params["fch_w"], params["fch_b"])

        # Head tail: BN (batch stats) + ReLU + Linear2 + normalize over the
        # tiny (2, B, 128) activation -- single block.
        # TODO(synk): tile this stage (two-pass BN) if B grows so large that
        # (2, B, 128) f32 no longer fits comfortably in VMEM.
        head_bytes = (2 * b_pad * DIM_IN * 4 + 2 * b_pad * LANE * 4
                      + DIM_IN * LANE * 2 + 3 * DIM_IN * 4)
        vmem2 = int(min(64 << 20, max(16 << 20, 3 * head_bytes + (4 << 20))))
        feat_pad = pl.pallas_call(
            functools.partial(_head_tail_kernel, B),
            in_specs=[_VMEM, _VMEM, _VMEM],
            out_specs=_VMEM,
            out_shape=jax.ShapeDtypeStruct((2, b_pad, LANE), jnp.float32),
            compiler_params=pltpu.CompilerParams(vmem_limit_bytes=vmem2),
            cost_estimate=pl.CostEstimate(
                flops=2 * 2 * b_pad * DIM_IN * LANE,
                transcendentals=2 * (b_pad + DIM_IN),
                bytes_accessed=head_bytes),
        )(h_all, params["head_vec"], params["h2_w"])

        # TODO(synk): downstream losses could consume the padded 128-lane slabs
        # directly; these slices only restore the exact PyTorch output shapes.
        feat_mlp2 = feat_pad[0, :B, :FEAT_DIM]
        feat_mlp3 = feat_pad[1, :B, :FEAT_DIM]
        logits = logits_pad[:B, :NUM_CLASSES]
        return feat_mlp2, feat_mlp3, logits

    elif mode == "eval":
        logits_pad = pl.pallas_call(
            _eval_kernel,
            grid=grid,
            in_specs=[x_spec, enc_w_spec, enc_b_spec, fch_w_spec, fch_b_spec],
            out_specs=logits_spec,
            out_shape=jax.ShapeDtypeStruct((b_pad, LANE), jnp.float32),
            compiler_params=cparams1,
            cost_estimate=pl.CostEstimate(
                flops=2 * b_pad * K * DIM_IN + 2 * b_pad * DIM_IN * FUSED,
                transcendentals=0,
                bytes_accessed=b_pad * K * 2 + wgt_bytes + b_pad * LANE * 4),
        )(x1, params["enc_w"], params["enc_b"],
          params["fch_w"], params["fch_b"])
        return logits_pad[:B, :NUM_CLASSES]
    else:
        raise ValueError("Unknown mode")


# ----------------------------- param init -----------------------------------
def _linear_init(key, fan_in, fan_out):
    # PyTorch nn.Linear default: U(-1/sqrt(fan_in), 1/sqrt(fan_in))
    kw, kb = jax.random.split(key)
    bound = 1.0 / jnp.sqrt(jnp.float32(fan_in))
    w = jax.random.uniform(kw, (fan_in, fan_out), jnp.float32, -bound, bound)
    b = jax.random.uniform(kb, (1, fan_out), jnp.float32, -bound, bound)
    return w, b


def _pad_cols(a, n):
    out = jnp.zeros((a.shape[0], n), a.dtype)
    return out.at[:, :a.shape[1]].set(a)


def init_params(key, in_features):
    k0, k1, k2, k3 = jax.random.split(key, 4)
    enc_w, enc_b = _linear_init(k0, in_features, DIM_IN)
    h1_w, h1_b = _linear_init(k1, DIM_IN, DIM_IN)
    h2_w, h2_b = _linear_init(k2, DIM_IN, FEAT_DIM)
    fc_w, fc_b = _linear_init(k3, DIM_IN, NUM_CLASSES)
    # Fused (D, 256) RHS: first 128 lanes = fc (padded), last 128 = head linear1.
    fch_w = jnp.concatenate([_pad_cols(fc_w, LANE), h1_w], axis=1)
    fch_b = jnp.concatenate([_pad_cols(fc_b, LANE), h1_b], axis=1)
    # Packed (3, 128) head vectors: [bn_gamma ; bn_beta ; h2_bias (padded)].
    head_vec = jnp.concatenate([jnp.ones((1, DIM_IN), jnp.float32),
                                jnp.zeros((1, DIM_IN), jnp.float32),
                                _pad_cols(h2_b, LANE)], axis=0)
    return {
        # weights stored bf16 (native MXU operand), biases/BN params f32
        "enc_w": enc_w.astype(jnp.bfloat16), "enc_b": enc_b,
        "fch_w": fch_w.astype(jnp.bfloat16), "fch_b": fch_b,
        "head_vec": head_vec,
        "h2_w": _pad_cols(h2_w, LANE).astype(jnp.bfloat16),
    }


# ----------------------------- pure-JAX reference ----------------------------
def _ref_forward(params, data, data_t1, data_t2):
    fc_w = params["fch_w"][:, :LANE]
    h1_w = params["fch_w"][:, LANE:]
    fc_b = params["fch_b"][:, :LANE]
    h1_b = params["fch_b"][:, LANE:]
    bn_g = params["head_vec"][0:1]
    bn_b = params["head_vec"][1:2]
    h2_b = params["head_vec"][2:3]

    def flat_bf16(x):
        return x.reshape(x.shape[0], -1).astype(jnp.bfloat16)

    def enc(x):
        y = jnp.dot(flat_bf16(x), params["enc_w"],
                    preferred_element_type=jnp.float32) + params["enc_b"]
        return jnp.maximum(y, 0.0)

    def head(f):
        h = jnp.dot(f.astype(jnp.bfloat16), h1_w,
                    preferred_element_type=jnp.float32) + h1_b
        mean = jnp.mean(h, axis=0, keepdims=True)
        var = jnp.mean((h - mean) ** 2, axis=0, keepdims=True)
        hn = (h - mean) * jax.lax.rsqrt(var + BN_EPS) * bn_g + bn_b
        hr = jnp.maximum(hn, 0.0)
        z = (jnp.dot(hr.astype(jnp.bfloat16), params["h2_w"],
                     preferred_element_type=jnp.float32) + h2_b)[:, :FEAT_DIM]
        nrm = jnp.sqrt(jnp.sum(z * z, axis=1, keepdims=True))
        return z / jnp.maximum(nrm, NORM_EPS)

    f1, f2, f3 = enc(data), enc(data_t1), enc(data_t2)
    logits = (jnp.dot(f1.astype(jnp.bfloat16), fc_w,
                      preferred_element_type=jnp.float32)
              + fc_b)[:, :NUM_CLASSES]
    return head(f2), head(f3), logits


# ----------------------------- main -----------------------------------------
if __name__ == "__main__":
    key = jax.random.PRNGKey(0)
    B, C, L = 8, 2, 64  # small 1-D signal batch; C*L = 128 = encoder fan-in

    k_p, k_d, k_t1, k_t2 = jax.random.split(key, 4)
    params = init_params(k_p, C * L)
    data = jax.random.normal(k_d, (B, C, L), jnp.float32)
    data_t1 = jax.random.normal(k_t1, (B, C, L), jnp.float32)
    data_t2 = jax.random.normal(k_t2, (B, C, L), jnp.float32)

    feat_mlp2, feat_mlp3, logits = ccqnet_forward(
        params, data, data_t1, data_t2, mode="train")
    jax.block_until_ready((feat_mlp2, feat_mlp3, logits))

    assert feat_mlp2.shape == (B, FEAT_DIM)
    assert feat_mlp3.shape == (B, FEAT_DIM)
    assert logits.shape == (B, NUM_CLASSES)
    # sanity: F.normalize(dim=1) output rows are unit-norm
    assert bool(jnp.allclose(jnp.linalg.norm(feat_mlp2, axis=1), 1.0, atol=1e-4))
    assert bool(jnp.allclose(jnp.linalg.norm(feat_mlp3, axis=1), 1.0, atol=1e-4))

    # compare against a pure-JAX reference using the same bf16/f32 math
    r2, r3, rl = _ref_forward(params, data, data_t1, data_t2)
    assert bool(jnp.allclose(feat_mlp2, r2, atol=1e-2, rtol=1e-2))
    assert bool(jnp.allclose(feat_mlp3, r3, atol=1e-2, rtol=1e-2))
    assert bool(jnp.allclose(logits, rl, atol=1e-2, rtol=1e-2))

    # also exercise eval mode path (shares encoder + fc with view 1 of train)
    logits_eval = ccqnet_forward(params, data, mode="eval")
    jax.block_until_ready(logits_eval)
    assert logits_eval.shape == (B, NUM_CLASSES)
    assert bool(jnp.allclose(logits_eval, rl, atol=1e-2, rtol=1e-2))

    print("KERNEL_OK")
</pallas_src>

<mosaic_0001>
module attributes {stable_mosaic.version = 11 : i64} {
  func.func @_enc_fc_h1_kernel(%arg0: i32, %arg1: memref<8x128xbf16, #tpu.memory_space<vmem>>, %arg2: memref<8x128xbf16, #tpu.memory_space<vmem>>, %arg3: memref<8x128xbf16, #tpu.memory_space<vmem>>, %arg4: memref<128x128xbf16, #tpu.memory_space<vmem>>, %arg5: memref<1x128xf32, #tpu.memory_space<vmem>>, %arg6: memref<128x256xbf16, #tpu.memory_space<vmem>>, %arg7: memref<1x256xf32, #tpu.memory_space<vmem>>, %arg8: memref<8x128xf32, #tpu.memory_space<vmem>>, %arg9: memref<2x8x128xf32, #tpu.memory_space<vmem>>) attributes {dimension_semantics = [#tpu.dimension_semantics<parallel>], iteration_bounds = array<i64: 1>, scalar_prefetch = 0 : i64, scratch_operands = 0 : i64, tpu.core_type = #tpu.core_type<tc>, window_params = [{transform_indices = @transform_0, window_bounds = array<i64: 8, 128>}, {transform_indices = @transform_1, window_bounds = array<i64: 8, 128>}, {transform_indices = @transform_2, window_bounds = array<i64: 8, 128>}, {pipeline_mode = #tpu.pipeline_mode<synchronous>, transform_indices = @transform_3, window_bounds = array<i64: 128, 128>}, {pipeline_mode = #tpu.pipeline_mode<synchronous>, transform_indices = @transform_4, window_bounds = array<i64: 1, 128>}, {pipeline_mode = #tpu.pipeline_mode<synchronous>, transform_indices = @transform_5, window_bounds = array<i64: 128, 256>}, {pipeline_mode = #tpu.pipeline_mode<synchronous>, transform_indices = @transform_6, window_bounds = array<i64: 1, 256>}, {transform_indices = @transform_7, window_bounds = array<i64: 8, 128>}, {transform_indices = @transform_8, window_bounds = array<i64: 2, 8, 128>}]} {
    %c0 = arith.constant 0 : index
    %c0_0 = arith.constant 0 : index
    %0 = vector.load %arg4[%c0, %c0_0] : memref<128x128xbf16, #tpu.memory_space<vmem>>, vector<128x128xbf16>
    %c0_1 = arith.constant 0 : index
    %c0_2 = arith.constant 0 : index
    %1 = vector.load %arg5[%c0_1, %c0_2] : memref<1x128xf32, #tpu.memory_space<vmem>>, vector<1x128xf32>
    %c0_3 = arith.constant 0 : index
    %c0_4 = arith.constant 0 : index
    %2 = vector.load %arg6[%c0_3, %c0_4] : memref<128x256xbf16, #tpu.memory_space<vmem>>, vector<128x256xbf16>
    %c0_5 = arith.constant 0 : index
    %c0_6 = arith.constant 0 : index
    %3 = vector.load %arg7[%c0_5, %c0_6] : memref<1x256xf32, #tpu.memory_space<vmem>>, vector<1x256xf32>
    %c0_7 = arith.constant 0 : index
    %c0_8 = arith.constant 0 : index
    %4 = vector.load %arg1[%c0_7, %c0_8] : memref<8x128xbf16, #tpu.memory_space<vmem>>, vector<8x128xbf16>
    %cst = arith.constant dense<0.000000e+00> : vector<8x128xf32>
    %5 = tpu.matmul %4, %0, %cst {dimension_numbers = #tpu.dot_dimension_numbers<[1], [0], [0], [1], [0, 0, 1, 1], [], []>} : vector<8x128xbf16>, vector<128x128xbf16>, vector<8x128xf32> -> vector<8x128xf32>
    %6 = vector.broadcast %1 : vector<1x128xf32> to vector<8x128xf32>
    %7 = arith.addf %5, %6 : vector<8x128xf32>
    %cst_9 = arith.constant 0.000000e+00 : f32
    %8 = vector.broadcast %cst_9 : f32 to vector<8x128xf32>
    %9 = arith.maximumf %7, %8 : vector<8x128xf32>
    %10 = arith.truncf %9 : vector<8x128xf32> to vector<8x128xbf16>
    %cst_10 = arith.constant dense<0.000000e+00> : vector<8x256xf32>
    %11 = tpu.matmul %10, %2, %cst_10 {dimension_numbers = #tpu.dot_dimension_numbers<[1], [0], [0], [1], [0, 0, 1, 1], [], []>} : vector<8x128xbf16>, vector<128x256xbf16>, vector<8x256xf32> -> vector<8x256xf32>
    %12 = vector.broadcast %3 : vector<1x256xf32> to vector<8x256xf32>
    %13 = arith.addf %11, %12 : vector<8x256xf32>
    %14 = vector.extract_strided_slice %13 {offsets = [0, 0], sizes = [8, 128], strides = [1, 1]} : vector<8x256xf32> to vector<8x128xf32>
    %c0_11 = arith.constant 0 : index
    %c0_12 = arith.constant 0 : index
    %15 = vector.load %arg8[%c0_11, %c0_12] : memref<8x128xf32, #tpu.memory_space<vmem>>, vector<8x128xf32>
    tpu.vector_store %arg8[%c0_11, %c0_12], %14 {strides = array<i32>} : memref<8x128xf32, #tpu.memory_space<vmem>>, vector<8x128xf32>,
    %c0_13 = arith.constant 0 : index
    %c0_14 = arith.constant 0 : index
    %16 = vector.load %arg2[%c0_13, %c0_14] : memref<8x128xbf16, #tpu.memory_space<vmem>>, vector<8x128xbf16>
    %cst_15 = arith.constant dense<0.000000e+00> : vector<8x128xf32>
    %17 = tpu.matmul %16, %0, %cst_15 {dimension_numbers = #tpu.dot_dimension_numbers<[1], [0], [0], [1], [0, 0, 1, 1], [], []>} : vector<8x128xbf16>, vector<128x128xbf16>, vector<8x128xf32> -> vector<8x128xf32>
    %18 = vector.broadcast %1 : vector<1x128xf32> to vector<8x128xf32>
    %19 = arith.addf %17, %18 : vector<8x128xf32>
    %cst_16 = arith.constant 0.000000e+00 : f32
    %20 = vector.broadcast %cst_16 : f32 to vector<8x128xf32>
    %21 = arith.maximumf %19, %20 : vector<8x128xf32>
    %22 = arith.truncf %21 : vector<8x128xf32> to vector<8x128xbf16>
    %cst_17 = arith.constant dense<0.000000e+00> : vector<8x256xf32>
    %23 = tpu.matmul %22, %2, %cst_17 {dimension_numbers = #tpu.dot_dimension_numbers<[1], [0], [0], [1], [0, 0, 1, 1], [], []>} : vector<8x128xbf16>, vector<128x256xbf16>, vector<8x256xf32> -> vector<8x256xf32>
    %24 = vector.broadcast %3 : vector<1x256xf32> to vector<8x256xf32>
    %25 = arith.addf %23, %24 : vector<8x256xf32>
    %26 = vector.extract_strided_slice %25 {offsets = [0, 128], sizes = [8, 128], strides = [1, 1]} : vector<8x256xf32> to vector<8x128xf32>
    %c0_18 = arith.constant 0 : index
    %c0_19 = arith.constant 0 : index
    %c0_20 = arith.constant 0 : index
    %27 = vector.load %arg9[%c0_18, %c0_19, %c0_20] : memref<2x8x128xf32, #tpu.memory_space<vmem>>, vector<1x8x128xf32>
    %28 = vector.shape_cast %27 : vector<1x8x128xf32> to vector<8x128xf32>
    %29 = vector.shape_cast %26 : vector<8x128xf32> to vector<1x8x128xf32>
    tpu.vector_store %arg9[%c0_18, %c0_19, %c0_20], %29 {strides = array<i32>} : memref<2x8x128xf32, #tpu.memory_space<vmem>>, vector<1x8x128xf32>,
    %c0_21 = arith.constant 0 : index
    %c0_22 = arith.constant 0 : index
    %30 = vector.load %arg3[%c0_21, %c0_22] : memref<8x128xbf16, #tpu.memory_space<vmem>>, vector<8x128xbf16>
    %cst_23 = arith.constant dense<0.000000e+00> : vector<8x128xf32>
    %31 = tpu.matmul %30, %0, %cst_23 {dimension_numbers = #tpu.dot_dimension_numbers<[1], [0], [0], [1], [0, 0, 1, 1], [], []>} : vector<8x128xbf16>, vector<128x128xbf16>, vector<8x128xf32> -> vector<8x128xf32>
    %32 = vector.broadcast %1 : vector<1x128xf32> to vector<8x128xf32>
    %33 = arith.addf %31, %32 : vector<8x128xf32>
    %cst_24 = arith.constant 0.000000e+00 : f32
    %34 = vector.broadcast %cst_24 : f32 to vector<8x128xf32>
    %35 = arith.maximumf %33, %34 : vector<8x128xf32>
    %36 = arith.truncf %35 : vector<8x128xf32> to vector<8x128xbf16>
    %cst_25 = arith.constant dense<0.000000e+00> : vector<8x256xf32>
    %37 = tpu.matmul %36, %2, %cst_25 {dimension_numbers = #tpu.dot_dimension_numbers<[1], [0], [0], [1], [0, 0, 1, 1], [], []>} : vector<8x128xbf16>, vector<128x256xbf16>, vector<8x256xf32> -> vector<8x256xf32>
    %38 = vector.broadcast %3 : vector<1x256xf32> to vector<8x256xf32>
    %39 = arith.addf %37, %38 : vector<8x256xf32>
    %40 = vector.extract_strided_slice %39 {offsets = [0, 128], sizes = [8, 128], strides = [1, 1]} : vector<8x256xf32> to vector<8x128xf32>
    %c1 = arith.constant 1 : index
    %c0_26 = arith.constant 0 : index
    %c0_27 = arith.constant 0 : index
    %41 = vector.load %arg9[%c1, %c0_26, %c0_27] : memref<2x8x128xf32, #tpu.memory_space<vmem>>, vector<1x8x128xf32>
    %42 = vector.shape_cast %41 : vector<1x8x128xf32> to vector<8x128xf32>
    %43 = vector.shape_cast %40 : vector<8x128xf32> to vector<1x8x128xf32>
    tpu.vector_store %arg9[%c1, %c0_26, %c0_27], %43 {strides = array<i32>} : memref<2x8x128xf32, #tpu.memory_space<vmem>>, vector<1x8x128xf32>,
    return
  }
  func.func @transform_0(%arg0: i32) -> (i32, i32) {
    %c0_i32 = arith.constant 0 : i32
    %c0_i32_0 = arith.constant 0 : i32
    return %arg0, %c0_i32 : i32, i32
  }
  func.func @transform_1(%arg0: i32) -> (i32, i32) {
    %c0_i32 = arith.constant 0 : i32
    %c0_i32_0 = arith.constant 0 : i32
    return %arg0, %c0_i32 : i32, i32
  }
  func.func @transform_2(%arg0: i32) -> (i32, i32) {
    %c0_i32 = arith.constant 0 : i32
    %c0_i32_0 = arith.constant 0 : i32
    return %arg0, %c0_i32 : i32, i32
  }
  func.func @transform_3(%arg0: i32) -> (i32, i32) {
    %c0_i32 = arith.constant 0 : i32
    %c0_i32_0 = arith.constant 0 : i32
    %c0_i32_1 = arith.constant 0 : i32
    return %c0_i32, %c0_i32_0 : i32, i32
  }
  func.func @transform_4(%arg0: i32) -> (i32, i32) {
    %c0_i32 = arith.constant 0 : i32
    %c0_i32_0 = arith.constant 0 : i32
    %c0_i32_1 = arith.constant 0 : i32
    return %c0_i32, %c0_i32_0 : i32, i32
  }
  func.func @transform_5(%arg0: i32) -> (i32, i32) {
    %c0_i32 = arith.constant 0 : i32
    %c0_i32_0 = arith.constant 0 : i32
    %c0_i32_1 = arith.constant 0 : i32
    return %c0_i32, %c0_i32_0 : i32, i32
  }
  func.func @transform_6(%arg0: i32) -> (i32, i32) {
    %c0_i32 = arith.constant 0 : i32
    %c0_i32_0 = arith.constant 0 : i32
    %c0_i32_1 = arith.constant 0 : i32
    return %c0_i32, %c0_i32_0 : i32, i32
  }
  func.func @transform_7(%arg0: i32) -> (i32, i32) {
    %c0_i32 = arith.constant 0 : i32
    %c0_i32_0 = arith.constant 0 : i32
    return %arg0, %c0_i32 : i32, i32
  }
  func.func @transform_8(%arg0: i32) -> (i32, i32, i32) {
    %c0_i32 = arith.constant 0 : i32
    %c0_i32_0 = arith.constant 0 : i32
    %c0_i32_1 = arith.constant 0 : i32
    return %c0_i32, %arg0, %c0_i32_0 : i32, i32, i32
  }
}

</mosaic_0001>

<llo_original>
// kernel: tpu_custom_call.1
$region0: #{tpu_custom_call.1}
  #allocation0 [shape = 'u32[]', space=smem, size = 0x4, offset = 0x4, fixed_abs, tag = 'smem constant byte address 0x4 - core index']
  #allocation1 [shape = 'u32[144,128]{1,0:T(1,128)}', space=vmem, size = 0x12000, scoped, tag = 'internal scratch']
  %s0 = inlined_call_operand.hbm [shape: bf16[8,128], index: 0, kind: input, shape index: {}]
  %s1 = inlined_call_operand.hbm [shape: bf16[8,128], index: 1, kind: input, shape index: {}]
  %s2 = inlined_call_operand.vmem [shape: bf16[8,128], index: 2, kind: input, shape index: {}]
  %s3 = inlined_call_operand.hbm [shape: bf16[128,128], index: 3, kind: input, shape index: {}]
  %s4 = inlined_call_operand.vmem [shape: f32[1,128], index: 4, kind: input, shape index: {}]
  %s5 = inlined_call_operand.hbm [shape: bf16[128,256], index: 5, kind: input, shape index: {}]
  %s6 = inlined_call_operand.vmem [shape: f32[1,256], index: 6, kind: input, shape index: {}]
  %s7 = inlined_call_operand.hbm [shape: f32[8,128], index: 7, kind: output, shape index: {0}]
  %s8 = inlined_call_operand.hbm [shape: f32[2,8,128], index: 8, kind: output, shape index: {1}]
  %9 = xla_tuple %s7, %s8
  %s10 = sld [smem:[#allocation0]]
  $region62: #{tpu_custom_call.1} parent=0
    _
  %s12 = ssub.s32 1, %s10
  %s13 = scalar_select 0, %s12, %s10
  $region1: #{tpu_custom_call.1} parent=0
    #allocation2 [shape = 'u8[2048]{0}', space=vmem, size = 0x800, scoped, tag = 'input window, operand 0, single buffered']
    #allocation3 [shape = 's32[1]{0}', space=sflag, size = 0x4, scoped, tag = 'scoped memory for tpu_custom_call.1']
    #allocation4 [shape = 's32[1]{0}', space=sflag, size = 0x4, scoped, tag = 'scoped memory for tpu_custom_call.1']
    #allocation5 [shape = 'u8[2048]{0}', space=vmem, size = 0x800, scoped, tag = 'input window, operand 1, single buffered']
    #allocation6 [shape = 's32[1]{0}', space=sflag, size = 0x4, scoped, tag = 'scoped memory for tpu_custom_call.1']
    #allocation7 [shape = 'u8[32768]{0}', space=vmem, size = 0x8000, scoped, tag = 'input window, operand 3, single buffered']
    #allocation8 [shape = 'u8[65536]{0}', space=vmem, size = 0x10000, scoped, tag = 'input window, operand 5, single buffered']
    #allocation9 [shape = 's32[1]{0}', space=sflag, size = 0x4, scoped, tag = 'scoped memory for tpu_custom_call.1']
    #allocation10 [shape = 'u8[4096]{0}', space=vmem, size = 0x1000, scoped, tag = 'output window, operand 0, single buffered']
    #allocation11 [shape = 'u8[8192]{0}', space=vmem, size = 0x2000, scoped, tag = 'output window, operand 1, single buffered']
    #allocation12 [shape = 's32[1]{0}', space=sflag, size = 0x4, scoped, tag = 'scoped memory for tpu_custom_call.1']
    %14 = vsyncpa [#allocation3], 0
    %15 = vsyncpa [#allocation6], 0
    %16 = vsyncpa [#allocation9], 0
    %17 = vsyncpa [#allocation4], 0
    %18 = vsyncpa [#allocation12], 0
    // Predicated region
    $region2: #{tpu_custom_call.1} parent=1 // pred_check
      _
    $region3: #{tpu_custom_call.1} parent=1 // pred_check_branch
      %20 = sbr.rel (0) target = $region5
    $region4: #{tpu_custom_call.1} parent=1 // pred_region
      %s22 = ssub.s32 64, 64
      %23 = vsyncadd [#allocation3], %s22
      %s25 = sshll.u32 [#allocation2], 4
      %s26 = int_to_ptr.vmem [resolvable:$true] %s25
      %28 = dma.hbm_to_vmem [thread:$0]  %s0, 64, %s26, [#allocation3]
    $region5: #{tpu_custom_call.1} parent=1 // pred_fallthru
      _
    // Predicated region
    $region6: #{tpu_custom_call.1} parent=1 // pred_check
      _
    $region7: #{tpu_custom_call.1} parent=1 // pred_check_branch
      %30 = sbr.rel (0) target = $region9
    $region8: #{tpu_custom_call.1} parent=1 // pred_region
      %s32 = ssub.s32 64, 64
      %33 = vsyncadd [#allocation6], %s32
      %s35 = sshll.u32 [#allocation5], 4
      %s36 = int_to_ptr.vmem [resolvable:$true] %s35
      %38 = dma.hbm_to_vmem [thread:$0]  %s1, 64, %s36, [#allocation6]
    $region9: #{tpu_custom_call.1} parent=1 // pred_fallthru
      _
    // Predicated region
    $region10: #{tpu_custom_call.1} parent=1 // pred_check
      _
    $region11: #{tpu_custom_call.1} parent=1 // pred_check_branch
      %40 = sbr.rel (0) target = $region13
    $region12: #{tpu_custom_call.1} parent=1 // pred_region
      _
    $region13: #{tpu_custom_call.1} parent=1 // pred_fallthru
      _
    // Predicated region
    $region14: #{tpu_custom_call.1} parent=1 // pred_check
      _
    $region15: #{tpu_custom_call.1} parent=1 // pred_check_branch
      %42 = sbr.rel (0) target = $region17
    $region16: #{tpu_custom_call.1} parent=1 // pred_region
      %s44 = ssub.s32 1024, 1024
      %45 = vsyncadd [#allocation6], %s44
      %s46 = sshll.u32 [#allocation7], 4
      %s47 = int_to_ptr.vmem [resolvable:$true] %s46
      %52 = dma.hbm_to_vmem [thread:$0]  %s3, 1024, %s47, [#allocation6], 64, 64, 4
    $region17: #{tpu_custom_call.1} parent=1 // pred_fallthru
      _
    // Predicated region
    $region18: #{tpu_custom_call.1} parent=1 // pred_check
      _
    $region19: #{tpu_custom_call.1} parent=1 // pred_check_branch
      %54 = sbr.rel (0) target = $region21
    $region20: #{tpu_custom_call.1} parent=1 // pred_region
      _
    $region21: #{tpu_custom_call.1} parent=1 // pred_fallthru
      _
    // Predicated region
    $region22: #{tpu_custom_call.1} parent=1 // pred_check
      _
    $region23: #{tpu_custom_call.1} parent=1 // pred_check_branch
      %56 = sbr.rel (0) target = $region25
    $region24: #{tpu_custom_call.1} parent=1 // pred_region
      %s58 = ssub.s32 2048, 2048
      %59 = vsyncadd [#allocation9], %s58
      %s60 = sshll.u32 [#allocation8], 4
      %s61 = int_to_ptr.vmem [resolvable:$true] %s60
      %66 = dma.hbm_to_vmem [thread:$0]  %s5, 2048, %s61, [#allocation9], 128, 128, 8
    $region25: #{tpu_custom_call.1} parent=1 // pred_fallthru
      _
    // Predicated region
    $region26: #{tpu_custom_call.1} parent=1 // pred_check
      _
    $region27: #{tpu_custom_call.1} parent=1 // pred_check_branch
      %68 = sbr.rel (0) target = $region29
    $region28: #{tpu_custom_call.1} parent=1 // pred_region
      _
    $region29: #{tpu_custom_call.1} parent=1 // pred_fallthru
      _
    // Predicated region
    $region30: #{tpu_custom_call.1} parent=1 // pred_check
      _
    $region31: #{tpu_custom_call.1} parent=1 // pred_check_branch
      %70 = sbr.rel (0) target = $region33
    $region32: #{tpu_custom_call.1} parent=1 // pred_region
      %71 = dma.done [#allocation3], 64
    $region33: #{tpu_custom_call.1} parent=1 // pred_fallthru
      _
    // Predicated region
    $region34: #{tpu_custom_call.1} parent=1 // pred_check
      _
    $region35: #{tpu_custom_call.1} parent=1 // pred_check_branch
      %73 = sbr.rel (0) target = $region37
    $region36: #{tpu_custom_call.1} parent=1 // pred_region
      %74 = dma.done [#allocation6], 64
    $region37: #{tpu_custom_call.1} parent=1 // pred_fallthru
      _
    // Predicated region
    $region38: #{tpu_custom_call.1} parent=1 // pred_check
      _
    $region39: #{tpu_custom_call.1} parent=1 // pred_check_branch
      %76 = sbr.rel (0) target = $region41
    $region40: #{tpu_custom_call.1} parent=1 // pred_region
      %77 = dma.done [#allocation6], 1024
    $region41: #{tpu_custom_call.1} parent=1 // pred_fallthru
      _
    // Predicated region
    $region42: #{tpu_custom_call.1} parent=1 // pred_check
      _
    $region43: #{tpu_custom_call.1} parent=1 // pred_check_branch
      %79 = sbr.rel (0) target = $region45
    $region44: #{tpu_custom_call.1} parent=1 // pred_region
      %80 = dma.done [#allocation9], 2048
    $region45: #{tpu_custom_call.1} parent=1 // pred_fallthru
      _
    %v82 = vld [vmem:[#allocation7] sm:$0xf]
    %v83 = vld [vmem:[#allocation7 + $0x4] sm:$0xf]
    %v84 = vld [vmem:[#allocation7 + $0x8] sm:$0xf]
    %v85 = vld [vmem:[#allocation7 + $0xc] sm:$0xf]
    %v86 = vld [vmem:[#allocation7 + $0x10] sm:$0xf]
    %v87 = vld [vmem:[#allocation7 + $0x14] sm:$0xf]
    %v88 = vld [vmem:[#allocation7 + $0x18] sm:$0xf]
    %v89 = vld [vmem:[#allocation7 + $0x1c] sm:$0xf]
    %v90 = vld [vmem:[#allocation7 + $0x20] sm:$0xf]
    %v91 = vld [vmem:[#allocation7 + $0x24] sm:$0xf]
    %v92 = vld [vmem:[#allocation7 + $0x28] sm:$0xf]
    %v93 = vld [vmem:[#allocation7 + $0x2c] sm:$0xf]
    %v94 = vld [vmem:[#allocation7 + $0x30] sm:$0xf]
    %v95 = vld [vmem:[#allocation7 + $0x34] sm:$0xf]
    %v96 = vld [vmem:[#allocation7 + $0x38] sm:$0xf]
    %v97 = vld [vmem:[#allocation7 + $0x3c] sm:$0xf]
    %v98 = vld [vmem:[%s4] sm:$0x1]
    %v99 = vld [vmem:[#allocation8] sm:$0xff]
    %v100 = vld [vmem:[#allocation8 + $0x8] sm:$0xff]
    %v101 = vld [vmem:[#allocation8 + $0x10] sm:$0xff]
    %v102 = vld [vmem:[#allocation8 + $0x18] sm:$0xff]
    %v103 = vld [vmem:[#allocation8 + $0x20] sm:$0xff]
    %v104 = vld [vmem:[#allocation8 + $0x28] sm:$0xff]
    %v105 = vld [vmem:[#allocation8 + $0x30] sm:$0xff]
    %v106 = vld [vmem:[#allocation8 + $0x38] sm:$0xff]
    %v107 = vld [vmem:[#allocation8 + $0x40] sm:$0xff]
    %v108 = vld [vmem:[#allocation8 + $0x48] sm:$0xff]
    %v109 = vld [vmem:[#allocation8 + $0x50] sm:$0xff]
    %v110 = vld [vmem:[#allocation8 + $0x58] sm:$0xff]
    %v111 = vld [vmem:[#allocation8 + $0x60] sm:$0xff]
    %v112 = vld [vmem:[#allocation8 + $0x68] sm:$0xff]
    %v113 = vld [vmem:[#allocation8 + $0x70] sm:$0xff]
    %v114 = vld [vmem:[#allocation8 + $0x78] sm:$0xff]
    %v115 = vld [vmem:[%s6] sm:$0x3]
    %v116 = vld [vmem:[#allocation2] sm:$0xf]
    %v118 = vlaneseq
    %v119 = vshrl.u32 %v118, 7
    %v120 = vsub.s32 0, %v119
    %v121 = vrot.slane %v98, %v120
    %v139 = vunpack.c.l.b16 %v82
    %v140 = vunpack.c.l.b16 %v83
    %v141 = vunpack.c.l.b16 %v84
    %v142 = vunpack.c.l.b16 %v85
    %v143 = vunpack.c.l.b16 %v86
    %v144 = vunpack.c.l.b16 %v87
    %v145 = vunpack.c.l.b16 %v88
    %v146 = vunpack.c.l.b16 %v89
    %v147 = vunpack.c.l.b16 %v90
    %v148 = vunpack.c.l.b16 %v91
    %v149 = vunpack.c.l.b16 %v92
    %v150 = vunpack.c.l.b16 %v93
    %v151 = vunpack.c.l.b16 %v94
    %v152 = vunpack.c.l.b16 %v95
    %v153 = vunpack.c.l.b16 %v96
    %v154 = vunpack.c.l.b16 %v97
    %v155 = vpack.c.b16 %v140, %v139
    %v156 = vpack.c.b16 %v142, %v141
    %v157 = vpack.c.b16 %v144, %v143
    %v158 = vpack.c.b16 %v146, %v145
    %v159 = vpack.c.b16 %v148, %v147
    %v160 = vpack.c.b16 %v150, %v149
    %v161 = vpack.c.b16 %v152, %v151
    %v162 = vpack.c.b16 %v154, %v153
    %171 = vmatprep.subr.bf16.mxu0 0
    %172 = vmatpush1.bf16.msra.mxu0 %v155
    %173 = vmatprep.subr.bf16.mxu0 0
    %174 = vmatpush1.bf16.msra.mxu0 %v156
    %175 = vmatprep.subr.bf16.mxu0 0
    %176 = vmatpush1.bf16.msra.mxu0 %v157
    %177 = vmatprep.subr.bf16.mxu0 0
    %178 = vmatpush1.bf16.msra.mxu0 %v158
    %179 = vmatprep.subr.bf16.mxu0 0
    %180 = vmatpush1.bf16.msra.mxu0 %v159
    %181 = vmatprep.subr.bf16.mxu0 0
    %182 = vmatpush1.bf16.msra.mxu0 %v160
    %183 = vmatprep.subr.bf16.mxu0 0
    %184 = vmatpush1.bf16.msra.mxu0 %v161
    %185 = vmatprep.subr.bf16.mxu0 0
    %186 = vmatpush1.bf16.msra.mxu0 %v162
    %187 = vmatprep.subr.bf16.mxu0 0
    %188 = vmatpush1.bf16.msra.mxu0 0
    %189 = vmatprep.subr.bf16.mxu0 0
    %190 = vmatpush1.bf16.msra.mxu0 0
    %191 = vmatprep.subr.bf16.mxu0 0
    %192 = vmatpush1.bf16.msra.mxu0 0
    %193 = vmatprep.subr.bf16.mxu0 0
    %194 = vmatpush1.bf16.msra.mxu0 0
    %195 = vmatprep.subr.bf16.mxu0 0
    %196 = vmatpush1.bf16.msra.mxu0 0
    %197 = vmatprep.subr.bf16.mxu0 0
    %198 = vmatpush1.bf16.msra.mxu0 0
    %199 = vmatprep.subr.bf16.mxu0 0
    %200 = vmatpush1.bf16.msra.mxu0 0
    %201 = vmatprep.subr.bf16.mxu0 0
    %202 = vmatpush1.bf16.msra.mxu0 0
    %203 = vmatprep.mubr.bf16.mxu0 0
    %204 = vmatmul.mubr.bf16.gmra.mrb[0].mxu0 %v116
    %v205 = vpop.f32.mrb[0].mxu0
    %v206 = vadd.f32 %v121, %v205
    %v207 = vpop.f32.mrb[0].mxu0
    %v208 = vpop.f32.mrb[0].mxu0
    %v209 = vpop.f32.mrb[0].mxu0
    %210 = vdwg.mxu0
    %v211 = vmax.f32 %v206, 0.0
    %v212 = vpack.c.bf16 %v211, %v211
    %v214 = vlaneseq
    %v215 = vshrl.u32 %v214, 7
    %v216 = vsub.s32 0, %v215
    %v217 = vrot.slane %v115, %v216
    %v218 = vlaneseq
    %v219 = vshrl.u32 %v218, 7
    %v220 = vsub.s32 1, %v219
    %v221 = vrot.slane %v115, %v220
    %v240 = vunpack.c.l.b16 %v99
    %v241 = vunpack.c.h.b16 %v99
    %v242 = vunpack.c.l.b16 %v100
    %v243 = vunpack.c.h.b16 %v100
    %v244 = vunpack.c.l.b16 %v101
    %v245 = vunpack.c.h.b16 %v101
    %v246 = vunpack.c.l.b16 %v102
    %v247 = vunpack.c.h.b16 %v102
    %v248 = vunpack.c.l.b16 %v103
    %v249 = vunpack.c.h.b16 %v103
    %v250 = vunpack.c.l.b16 %v104
    %v251 = vunpack.c.h.b16 %v104
    %v252 = vunpack.c.l.b16 %v105
    %v253 = vunpack.c.h.b16 %v105
    %v254 = vunpack.c.l.b16 %v106
    %v255 = vunpack.c.h.b16 %v106
    %v256 = vunpack.c.l.b16 %v107
    %v257 = vunpack.c.h.b16 %v107
    %v258 = vunpack.c.l.b16 %v108
    %v259 = vunpack.c.h.b16 %v108
    %v260 = vunpack.c.l.b16 %v109
    %v261 = vunpack.c.h.b16 %v109
    %v262 = vunpack.c.l.b16 %v110
    %v263 = vunpack.c.h.b16 %v110
    %v264 = vunpack.c.l.b16 %v111
    %v265 = vunpack.c.h.b16 %v111
    %v266 = vunpack.c.l.b16 %v112
    %v267 = vunpack.c.h.b16 %v112
    %v268 = vunpack.c.l.b16 %v113
    %v269 = vunpack.c.h.b16 %v113
    %v270 = vunpack.c.l.b16 %v114
    %v271 = vunpack.c.h.b16 %v114
    %v272 = vpack.c.b16 %v242, %v240
    %v273 = vpack.c.b16 %v243, %v241
    %v274 = vpack.c.b16 %v246, %v244
    %v275 = vpack.c.b16 %v247, %v245
    %v276 = vpack.c.b16 %v250, %v248
    %v277 = vpack.c.b16 %v251, %v249
    %v278 = vpack.c.b16 %v254, %v252
    %v279 = vpack.c.b16 %v255, %v253
    %v280 = vpack.c.b16 %v258, %v256
    %v281 = vpack.c.b16 %v259, %v257
    %v282 = vpack.c.b16 %v262, %v260
    %v283 = vpack.c.b16 %v263, %v261
    %v284 = vpack.c.b16 %v266, %v264
    %v285 = vpack.c.b16 %v267, %v265
    %v286 = vpack.c.b16 %v270, %v268
    %v287 = vpack.c.b16 %v271, %v269
    %304 = vmatprep.subr.bf16.mxu0 %v273
    %305 = vmatpush1.bf16.msra.mxu0 %v272
    %306 = vmatprep.subr.bf16.mxu0 %v275
    %307 = vmatpush1.bf16.msra.mxu0 %v274
    %308 = vmatprep.subr.bf16.mxu0 %v277
    %309 = vmatpush1.bf16.msra.mxu0 %v276
    %310 = vmatprep.subr.bf16.mxu0 %v279
    %311 = vmatpush1.bf16.msra.mxu0 %v278
    %312 = vmatprep.subr.bf16.mxu0 %v281
    %313 = vmatpush1.bf16.msra.mxu0 %v280
    %314 = vmatprep.subr.bf16.mxu0 %v283
    %315 = vmatpush1.bf16.msra.mxu0 %v282
    %316 = vmatprep.subr.bf16.mxu0 %v285
    %317 = vmatpush1.bf16.msra.mxu0 %v284
    %318 = vmatprep.subr.bf16.mxu0 %v287
    %319 = vmatpush1.bf16.msra.mxu0 %v286
    %320 = vmatprep.subr.bf16.mxu0 0
    %321 = vmatpush1.bf16.msra.mxu0 0
    %322 = vmatprep.subr.bf16.mxu0 0
    %323 = vmatpush1.bf16.msra.mxu0 0
    %324 = vmatprep.subr.bf16.mxu0 0
    %325 = vmatpush1.bf16.msra.mxu0 0
    %326 = vmatprep.subr.bf16.mxu0 0
    %327 = vmatpush1.bf16.msra.mxu0 0
    %328 = vmatprep.subr.bf16.mxu0 0
    %329 = vmatpush1.bf16.msra.mxu0 0
    %330 = vmatprep.subr.bf16.mxu0 0
    %331 = vmatpush1.bf16.msra.mxu0 0
    %332 = vmatprep.subr.bf16.mxu0 0
    %333 = vmatpush1.bf16.msra.mxu0 0
    %334 = vmatprep.subr.bf16.mxu0 0
    %335 = vmatpush1.bf16.msra.mxu0 0
    %336 = vmatprep.mubr.bf16.mxu0 0
    %337 = vmatmul.mubr.bf16.gmra.mrb[0].mxu0 %v212
    %v338 = vpop.f32.mrb[0].mxu0
    %v339 = vadd.f32 %v217, %v338
    %v340 = vpop.f32.mrb[0].mxu0
    %v341 = vpop.f32.mrb[0].mxu0
    %v342 = vpop.f32.mrb[0].mxu0
    %343 = vdwg.mxu0
    %344 = vst [vmem:[#allocation10] sm:$0xff] %v339
    %v345 = vld [vmem:[#allocation5] sm:$0xf]
    %346 = vmatprep.subr.bf16.mxu0 0
    %347 = vmatpush1.bf16.msra.mxu0 %v155
    %348 = vmatprep.subr.bf16.mxu0 0
    %349 = vmatpush1.bf16.msra.mxu0 %v156
    %350 = vmatprep.subr.bf16.mxu0 0
    %351 = vmatpush1.bf16.msra.mxu0 %v157
    %352 = vmatprep.subr.bf16.mxu0 0
    %353 = vmatpush1.bf16.msra.mxu0 %v158
    %354 = vmatprep.subr.bf16.mxu0 0
    %355 = vmatpush1.bf16.msra.mxu0 %v159
    %356 = vmatprep.subr.bf16.mxu0 0
    %357 = vmatpush1.bf16.msra.mxu0 %v160
    %358 = vmatprep.subr.bf16.mxu0 0
    %359 = vmatpush1.bf16.msra.mxu0 %v161
    %360 = vmatprep.subr.bf16.mxu0 0
    %361 = vmatpush1.bf16.msra.mxu0 %v162
    %362 = vmatprep.subr.bf16.mxu0 0
    %363 = vmatpush1.bf16.msra.mxu0 0
    %364 = vmatprep.subr.bf16.mxu0 0
    %365 = vmatpush1.bf16.msra.mxu0 0
    %366 = vmatprep.subr.bf16.mxu0 0
    %367 = vmatpush1.bf16.msra.mxu0 0
    %368 = vmatprep.subr.bf16.mxu0 0
    %369 = vmatpush1.bf16.msra.mxu0 0
    %370 = vmatprep.subr.bf16.mxu0 0
    %371 = vmatpush1.bf16.msra.mxu0 0
    %372 = vmatprep.subr.bf16.mxu0 0
    %373 = vmatpush1.bf16.msra.mxu0 0
    %374 = vmatprep.subr.bf16.mxu0 0
    %375 = vmatpush1.bf16.msra.mxu0 0
    %376 = vmatprep.subr.bf16.mxu0 0
    %377 = vmatpush1.bf16.msra.mxu0 0
    %378 = vmatprep.mubr.bf16.mxu0 0
    %379 = vmatmul.mubr.bf16.gmra.mrb[0].mxu0 %v345
    %v380 = vpop.f32.mrb[0].mxu0
    %v381 = vadd.f32 %v121, %v380
    %v382 = vpop.f32.mrb[0].mxu0
    %v383 = vpop.f32.mrb[0].mxu0
    %v384 = vpop.f32.mrb[0].mxu0
    %385 = vdwg.mxu0
    %v386 = vmax.f32 %v381, 0.0
    %v387 = vpack.c.bf16 %v386, %v386
    %388 = vmatprep.subr.bf16.mxu0 %v273
    %389 = vmatpush1.bf16.msra.mxu0 %v272
    %390 = vmatprep.subr.bf16.mxu0 %v275
    %391 = vmatpush1.bf16.msra.mxu0 %v274
    %392 = vmatprep.subr.bf16.mxu0 %v277
    %393 = vmatpush1.bf16.msra.mxu0 %v276
    %394 = vmatprep.subr.bf16.mxu0 %v279
    %395 = vmatpush1.bf16.msra.mxu0 %v278
    %396 = vmatprep.subr.bf16.mxu0 %v281
    %397 = vmatpush1.bf16.msra.mxu0 %v280
    %398 = vmatprep.subr.bf16.mxu0 %v283
    %399 = vmatpush1.bf16.msra.mxu0 %v282
    %400 = vmatprep.subr.bf16.mxu0 %v285
    %401 = vmatpush1.bf16.msra.mxu0 %v284
    %402 = vmatprep.subr.bf16.mxu0 %v287
    %403 = vmatpush1.bf16.msra.mxu0 %v286
    %404 = vmatprep.subr.bf16.mxu0 0
    %405 = vmatpush1.bf16.msra.mxu0 0
    %406 = vmatprep.subr.bf16.mxu0 0
    %407 = vmatpush1.bf16.msra.mxu0 0
    %408 = vmatprep.subr.bf16.mxu0 0
    %409 = vmatpush1.bf16.msra.mxu0 0
    %410 = vmatprep.subr.bf16.mxu0 0
    %411 = vmatpush1.bf16.msra.mxu0 0
    %412 = vmatprep.subr.bf16.mxu0 0
    %413 = vmatpush1.bf16.msra.mxu0 0
    %414 = vmatprep.subr.bf16.mxu0 0
    %415 = vmatpush1.bf16.msra.mxu0 0
    %416 = vmatprep.subr.bf16.mxu0 0
    %417 = vmatpush1.bf16.msra.mxu0 0
    %418 = vmatprep.subr.bf16.mxu0 0
    %419 = vmatpush1.bf16.msra.mxu0 0
    %420 = vmatprep.mubr.bf16.mxu0 0
    %421 = vmatmul.mubr.bf16.gmra.mrb[0].mxu0 %v387
    %v422 = vpop.f32.mrb[0].mxu0
    %v423 = vpop.f32.mrb[0].mxu0
    %v424 = vadd.f32 %v221, %v423
    %v425 = vpop.f32.mrb[0].mxu0
    %v426 = vpop.f32.mrb[0].mxu0
    %427 = vdwg.mxu0
    %428 = vst [vmem:[#allocation11] sm:$0xff] %v424
    %v429 = vld [vmem:[%s2] sm:$0xf]
    %430 = vmatprep.subr.bf16.mxu0 0
    %431 = vmatpush1.bf16.msra.mxu0 %v155
    %432 = vmatprep.subr.bf16.mxu0 0
    %433 = vmatpush1.bf16.msra.mxu0 %v156
    %434 = vmatprep.subr.bf16.mxu0 0
    %435 = vmatpush1.bf16.msra.mxu0 %v157
    %436 = vmatprep.subr.bf16.mxu0 0
    %437 = vmatpush1.bf16.msra.mxu0 %v158
    %438 = vmatprep.subr.bf16.mxu0 0
    %439 = vmatpush1.bf16.msra.mxu0 %v159
    %440 = vmatprep.subr.bf16.mxu0 0
    %441 = vmatpush1.bf16.msra.mxu0 %v160
    %442 = vmatprep.subr.bf16.mxu0 0
    %443 = vmatpush1.bf16.msra.mxu0 %v161
    %444 = vmatprep.subr.bf16.mxu0 0
    %445 = vmatpush1.bf16.msra.mxu0 %v162
    %446 = vmatprep.subr.bf16.mxu0 0
    %447 = vmatpush1.bf16.msra.mxu0 0
    %448 = vmatprep.subr.bf16.mxu0 0
    %449 = vmatpush1.bf16.msra.mxu0 0
    %450 = vmatprep.subr.bf16.mxu0 0
    %451 = vmatpush1.bf16.msra.mxu0 0
    %452 = vmatprep.subr.bf16.mxu0 0
    %453 = vmatpush1.bf16.msra.mxu0 0
    %454 = vmatprep.subr.bf16.mxu0 0
    %455 = vmatpush1.bf16.msra.mxu0 0
    %456 = vmatprep.subr.bf16.mxu0 0
    %457 = vmatpush1.bf16.msra.mxu0 0
    %458 = vmatprep.subr.bf16.mxu0 0
    %459 = vmatpush1.bf16.msra.mxu0 0
    %460 = vmatprep.subr.bf16.mxu0 0
    %461 = vmatpush1.bf16.msra.mxu0 0
    %462 = vmatprep.mubr.bf16.mxu0 0
    %463 = vmatmul.mubr.bf16.gmra.mrb[0].mxu0 %v429
    %v464 = vpop.f32.mrb[0].mxu0
    %v465 = vadd.f32 %v121, %v464
    %v466 = vpop.f32.mrb[0].mxu0
    %v467 = vpop.f32.mrb[0].mxu0
    %v468 = vpop.f32.mrb[0].mxu0
    %469 = vdwg.mxu0
    %v470 = vmax.f32 %v465, 0.0
    %v471 = vpack.c.bf16 %v470, %v470
    %472 = vmatprep.subr.bf16.mxu0 %v273
    %473 = vmatpush1.bf16.msra.mxu0 %v272
    %474 = vmatprep.subr.bf16.mxu0 %v275
    %475 = vmatpush1.bf16.msra.mxu0 %v274
    %476 = vmatprep.subr.bf16.mxu0 %v277
    %477 = vmatpush1.bf16.msra.mxu0 %v276
    %478 = vmatprep.subr.bf16.mxu0 %v279
    %479 = vmatpush1.bf16.msra.mxu0 %v278
    %480 = vmatprep.subr.bf16.mxu0 %v281
    %481 = vmatpush1.bf16.msra.mxu0 %v280
    %482 = vmatprep.subr.bf16.mxu0 %v283
    %483 = vmatpush1.bf16.msra.mxu0 %v282
    %484 = vmatprep.subr.bf16.mxu0 %v285
    %485 = vmatpush1.bf16.msra.mxu0 %v284
    %486 = vmatprep.subr.bf16.mxu0 %v287
    %487 = vmatpush1.bf16.msra.mxu0 %v286
    %488 = vmatprep.subr.bf16.mxu0 0
    %489 = vmatpush1.bf16.msra.mxu0 0
    %490 = vmatprep.subr.bf16.mxu0 0
    %491 = vmatpush1.bf16.msra.mxu0 0
    %492 = vmatprep.subr.bf16.mxu0 0
    %493 = vmatpush1.bf16.msra.mxu0 0
    %494 = vmatprep.subr.bf16.mxu0 0
    %495 = vmatpush1.bf16.msra.mxu0 0
    %496 = vmatprep.subr.bf16.mxu0 0
    %497 = vmatpush1.bf16.msra.mxu0 0
    %498 = vmatprep.subr.bf16.mxu0 0
    %499 = vmatpush1.bf16.msra.mxu0 0
    %500 = vmatprep.subr.bf16.mxu0 0
    %501 = vmatpush1.bf16.msra.mxu0 0
    %502 = vmatprep.subr.bf16.mxu0 0
    %503 = vmatpush1.bf16.msra.mxu0 0
    %504 = vmatprep.mubr.bf16.mxu0 0
    %505 = vmatmul.mubr.bf16.gmra.mrb[0].mxu0 %v471
    %v506 = vpop.f32.mrb[0].mxu0
    %v507 = vpop.f32.mrb[0].mxu0
    %v508 = vadd.f32 %v221, %v507
    %v509 = vpop.f32.mrb[0].mxu0
    %v510 = vpop.f32.mrb[0].mxu0
    %511 = vdwg.mxu0
    %s512 = scalar_lea.vmem [#allocation11], 8
    %513 = vst [vmem:[%s512] sm:$0xff] %v508
    // Predicated region
    $region46: #{tpu_custom_call.1} parent=1 // pred_check
      _
    $region47: #{tpu_custom_call.1} parent=1 // pred_check_branch
      %515 = sbr.rel (0) target = $region49
    $region48: #{tpu_custom_call.1} parent=1 // pred_region
      %s517 = ssub.s32 128, 128
      %518 = vsyncadd [#allocation4], %s517
      %s520 = sshll.u32 [#allocation10], 4
      %s521 = int_to_ptr.vmem [resolvable:$true] %s520
      %523 = dma.vmem_to_hbm [thread:$0]  %s521, 128, %s7, [#allocation4]
    $region49: #{tpu_custom_call.1} parent=1 // pred_fallthru
      _
    // Predicated region
    $region50: #{tpu_custom_call.1} parent=1 // pred_check
      _
    $region51: #{tpu_custom_call.1} parent=1 // pred_check_branch
      %525 = sbr.rel (0) target = $region53
    $region52: #{tpu_custom_call.1} parent=1 // pred_region
      %s527 = ssub.s32 256, 256
      %528 = vsyncadd [#allocation12], %s527
      %s529 = sshll.u32 [#allocation11], 4
      %s530 = int_to_ptr.vmem [resolvable:$true] %s529
      %535 = dma.vmem_to_hbm [thread:$0]  %s530, 256, %s8, [#allocation12], 128, 128, 8
    $region53: #{tpu_custom_call.1} parent=1 // pred_fallthru
      _
    // Predicated region
    $region54: #{tpu_custom_call.1} parent=1 // pred_check
      _
    $region55: #{tpu_custom_call.1} parent=1 // pred_check_branch
      %537 = sbr.rel (0) target = $region57
    $region56: #{tpu_custom_call.1} parent=1 // pred_region
      %538 = dma.done [#allocation4], 128
    $region57: #{tpu_custom_call.1} parent=1 // pred_fallthru
      _
    // Predicated region
    $region58: #{tpu_custom_call.1} parent=1 // pred_check
      _
    $region59: #{tpu_custom_call.1} parent=1 // pred_check_branch
      %540 = sbr.rel (0) target = $region61
    $region60: #{tpu_custom_call.1} parent=1 // pred_region
      %541 = dma.done [#allocation12], 256
    $region61: #{tpu_custom_call.1} parent=1 // pred_fallthru
      _
    %542 = vsyncpa [#allocation3], 1
    %543 = vsyncpa [#allocation6], 1
    %544 = vsyncpa [#allocation9], 1
    %545 = vsyncpa [#allocation4], 1
    %546 = vsyncpa [#allocation12], 1

</llo_original>
